<compile_context>
chip_gen: v5e
topology: v5e:2x2
jax: 0.10.0
libtpu: 0.0.40
codegen_flags: <defaults>
</compile_context>

<pallas_src>
import functools

import jax
import jax.numpy as jnp
from jax import lax
from jax.experimental import pallas as pl
from jax.experimental.pallas import tpu as pltpu

# ----------------------------- config --------------------------------------
B = 8                              # batch (demo)
INPUT_DIM = 23                     # raw feature dim (column 0 = categorical id)
EMBED_DIM = 10                     # Embedding(3, 10)
LAYER_NUM = 3
D = INPUT_DIM - 1 + EMBED_DIM      # = 32, dim after [embed | continuous]
N_HEAD = 1 + 4                     # regressor (1) + classifier (4), merged

# packed-parameter row offsets (all multiples of 8; lane width = 128)
R_EMB = 0                          # (D, 3)        embed^T zero-extended
R_PT = 32                          # (D, INPUT_DIM) constant placement matrix
R_CK = 64                          # (LAYER_NUM, D) cross kernels, transposed
R_DB = 72                          # (D, LAYER_NUM) deep biases, transposed
R_WHC = 104                        # (N_HEAD, D)    head weights on x_cross
R_WHD = 112                        # (N_HEAD, D)    head weights on x_deep
R_BH = 120                         # (N_HEAD, 1)    merged head bias
R_DW = 128                         # LAYER_NUM x (D, D) deep weights, transposed
P_ROWS = R_DW + LAYER_NUM * D      # = 224


# ----------------------------- kernel --------------------------------------
def dcn_kernel(x_ref, p_ref, out_ref):
    """One batch tile per grid step; (feature, batch) layout throughout.

    x_ref   : (INPUT_DIM, TB)  raw features transposed; row 0 = categorical id
    p_ref   : (P_ROWS, 128)    packed parameters (layout: see prepare_params)
    out_ref : (N_HEAD, TB)     merged [regressor | classifier] output, transposed
    """
    x = x_ref[...]                                            # (IN, TB) f32
    tb = x.shape[1]

    # ---- fused embedding lookup + feature placement -> x0 (D, TB) ----------
    # NOTE: ids truncate toward zero like torch .long(); ids outside {0,1,2}
    # silently map to a zero embedding (torch.nn.Embedding would raise).
    ids = x[0:1, :].astype(jnp.int32)                         # (1, TB)
    iota3 = lax.broadcasted_iota(jnp.int32, (3, tb), 0)       # (3, TB)
    onehot = (iota3 == ids).astype(jnp.float32)               # (3, TB)
    emb_t = p_ref[R_EMB:R_EMB + D, 0:3]                       # (D, 3)
    proj_t = p_ref[R_PT:R_PT + D, 0:INPUT_DIM]                # (D, IN) const 0/1
    x0 = (jnp.dot(emb_t, onehot, preferred_element_type=jnp.float32)
          + jnp.dot(proj_t, x, preferred_element_type=jnp.float32))   # (D, TB)

    # ---- Cross network, closed form (valid ONLY because there is no bias
    #      term in the cross layers; do NOT reuse if a bias is ever added) ---
    ck_t = p_ref[R_CK:R_CK + LAYER_NUM, 0:D]                  # (L, D)
    s = jnp.dot(ck_t, x0, preferred_element_type=jnp.float32)  # (L, TB)
    scale = 1.0 + s[0:1, :]
    for i in range(1, LAYER_NUM):
        scale = scale * (1.0 + s[i:i + 1, :])                 # (1, TB)
    xc = x0 * scale                                           # (D, TB)

    # ---- Deep network: LAYER_NUM x (Linear + ReLU), transposed -------------
    db_t = p_ref[R_DB:R_DB + D, 0:LAYER_NUM]                  # (D, L)
    xd = x0
    for i in range(LAYER_NUM):
        w_t = p_ref[R_DW + i * D:R_DW + (i + 1) * D, 0:D]     # (D, D) = dw[i]^T
        xd = jnp.maximum(
            jnp.dot(w_t, xd, preferred_element_type=jnp.float32)
            + db_t[:, i:i + 1], 0.0)                          # (D, TB)

    # ---- Merged heads: out^T = Whc^T @ xc + Whd^T @ xd + bh^T --------------
    whc_t = p_ref[R_WHC:R_WHC + N_HEAD, 0:D]                  # (5, D)
    whd_t = p_ref[R_WHD:R_WHD + N_HEAD, 0:D]                  # (5, D)
    bh_t = p_ref[R_BH:R_BH + N_HEAD, 0:1]                     # (5, 1)
    out = (jnp.dot(whc_t, xc, preferred_element_type=jnp.float32)
           + jnp.dot(whd_t, xd, preferred_element_type=jnp.float32)
           + bh_t)                                            # (5, TB)
    out_ref[...] = out.astype(out_ref.dtype)                  # lane-dense store


# ----------------------------- wrapper --------------------------------------
def _choose_tb(b, block_b):
    """Batch tile: whole batch unless it's large and 128-divisible, in which
    case split into >=2 lane-aligned tiles (lets v7x shard across its 2 TCs)."""
    if b <= 128 or b % 128 != 0:
        return b
    tb = max(128, min(block_b, b // 2))
    tb = (tb // 128) * 128
    while b % tb != 0:
        tb -= 128
    return tb


def dcn_pallas(x, packed, *, block_b=512):
    b, in_dim = x.shape
    assert in_dim == INPUT_DIM
    assert packed.shape == (P_ROWS, 128)
    tb = _choose_tb(b, block_b)
    assert b % tb == 0
    grid = (b // tb,)

    flops = 2 * b * (3 * D + INPUT_DIM * D + LAYER_NUM * D
                     + LAYER_NUM * D * D + 2 * D * N_HEAD)
    bytes_accessed = 4 * (x.size + packed.size + b * N_HEAD)

    out_t = pl.pallas_call(
        dcn_kernel,
        out_shape=jax.ShapeDtypeStruct((N_HEAD, b), jnp.float32),
        grid=grid,
        in_specs=[
            pl.BlockSpec((INPUT_DIM, tb), lambda i: (0, i)),   # x^T
            pl.BlockSpec((P_ROWS, 128), lambda i: (0, 0)),     # packed params
        ],
        out_specs=pl.BlockSpec((N_HEAD, tb), lambda i: (0, i)),
        compiler_params=pltpu.CompilerParams(
            dimension_semantics=("parallel",)),
        cost_estimate=pl.CostEstimate(flops=flops, transcendentals=0,
                                      bytes_accessed=bytes_accessed),
    )(x.T, packed)

    reg = out_t[0:1, :].T          # (B, 1)
    cls = out_t[1:N_HEAD, :].T     # (B, 4)
    return reg, cls


# ------------------------- parameter init (deterministic) -------------------
def init_params(key):
    ks = jax.random.split(key, 8)
    embed = jax.random.normal(ks[0], (3, EMBED_DIM), jnp.float32)       # N(0,1)
    std = (2.0 / (D + 1)) ** 0.5                                        # xavier_normal (D,1)
    ck = jax.random.normal(ks[1], (D, LAYER_NUM), jnp.float32) * std
    dw = jax.random.normal(ks[2], (LAYER_NUM, D, D), jnp.float32) / D ** 0.5
    db = jax.random.normal(ks[3], (LAYER_NUM, D), jnp.float32) * 0.01
    wr = jax.random.normal(ks[4], (2 * D, 1), jnp.float32) / (2 * D) ** 0.5
    br = jax.random.normal(ks[5], (1, 1), jnp.float32) * 0.01
    wc = jax.random.normal(ks[6], (2 * D, 4), jnp.float32) / (2 * D) ** 0.5
    bc = jax.random.normal(ks[7], (1, 4), jnp.float32) * 0.01
    return embed, ck, dw, db, wr, br, wc, bc


def prepare_params(embed, ck, dw, db, wr, br, wc, bc):
    """One-time host-side transforms: transpose everything to the
    (feature, batch) layout and pack every parameter into one (P_ROWS, 128)
    f32 buffer so the kernel needs just 2 input DMAs."""
    p = jnp.zeros((P_ROWS, 128), jnp.float32)
    # Embedding table, transposed + zero-extended to D rows (rows [10,32) = 0).
    emb_t = jnp.zeros((D, 3), jnp.float32).at[:EMBED_DIM, :].set(embed.T)
    # Constant 0/1 placement: x^T row c (c>=1) -> x0^T row c + EMBED_DIM - 1.
    r = jnp.arange(D)[:, None]
    c = jnp.arange(INPUT_DIM)[None, :]
    proj_t = ((c >= 1) & (r == c + EMBED_DIM - 1)).astype(jnp.float32)
    wh = jnp.concatenate([wr, wc], axis=1)                    # (2D, 5)
    bh = jnp.concatenate([br, bc], axis=1)                    # (1, 5)

    p = p.at[R_EMB:R_EMB + D, 0:3].set(emb_t)
    p = p.at[R_PT:R_PT + D, 0:INPUT_DIM].set(proj_t)
    p = p.at[R_CK:R_CK + LAYER_NUM, 0:D].set(ck.T)
    p = p.at[R_DB:R_DB + D, 0:LAYER_NUM].set(db.T)
    p = p.at[R_WHC:R_WHC + N_HEAD, 0:D].set(wh[:D, :].T)
    p = p.at[R_WHD:R_WHD + N_HEAD, 0:D].set(wh[D:, :].T)
    p = p.at[R_BH:R_BH + N_HEAD, 0:1].set(bh.T)
    for i in range(LAYER_NUM):
        p = p.at[R_DW + i * D:R_DW + (i + 1) * D, 0:D].set(dw[i].T)
    return p


# ----------------------------- pure-JAX reference ----------------------------
def dcn_reference(x, embed, ck, dw, db, wr, br, wc, bc):
    idx = x[:, 0].astype(jnp.int32)
    x0 = jnp.concatenate([embed[idx], x[:, 1:]], axis=1)      # (B, D)
    xc = x0
    for i in range(LAYER_NUM):
        xw = xc @ ck[:, i:i + 1]                              # (B, 1)
        xc = x0 * xw + xc
    xd = x0
    for i in range(LAYER_NUM):
        xd = jnp.maximum(xd @ dw[i] + db[i][None, :], 0.0)
    cat = jnp.concatenate([xc, xd], axis=1)
    return cat @ wr + br, cat @ wc + bc


# ----------------------------- main ------------------------------------------
if __name__ == "__main__":
    key = jax.random.PRNGKey(0)
    k_params, k_ids, k_cont = jax.random.split(key, 3)

    params = init_params(k_params)
    packed = prepare_params(*params)

    # Input x: (B, INPUT_DIM); first column = categorical id in {0,1,2} as float.
    ids = jax.random.randint(k_ids, (B, 1), 0, 3).astype(jnp.float32)
    cont = jax.random.normal(k_cont, (B, INPUT_DIM - 1), jnp.float32)
    x = jnp.concatenate([ids, cont], axis=1)

    fwd = functools.partial(jax.jit, static_argnames=("block_b",))(dcn_pallas)
    reg_out, cls_out = fwd(x, packed)
    jax.block_until_ready((reg_out, cls_out))

    reg_ref, cls_ref = dcn_reference(x, *params)
    assert reg_out.shape == (B, 1) and cls_out.shape == (B, 4)
    assert jnp.allclose(reg_out, reg_ref, atol=1e-3, rtol=1e-3), (
        float(jnp.max(jnp.abs(reg_out - reg_ref))))
    assert jnp.allclose(cls_out, cls_ref, atol=1e-3, rtol=1e-3), (
        float(jnp.max(jnp.abs(cls_out - cls_ref))))

    print("KERNEL_OK")
</pallas_src>

<mosaic_0001>
module attributes {stable_mosaic.version = 11 : i64} {
  func.func @dcn_kernel(%arg0: i32, %arg1: memref<23x8xf32, #tpu.memory_space<vmem>>, %arg2: memref<224x128xf32, #tpu.memory_space<vmem>>, %arg3: memref<5x8xf32, #tpu.memory_space<vmem>>) attributes {dimension_semantics = [#tpu.dimension_semantics<parallel>], iteration_bounds = array<i64: 1>, scalar_prefetch = 0 : i64, scratch_operands = 0 : i64, tpu.core_type = #tpu.core_type<tc>, window_params = [{transform_indices = @transform_0, window_bounds = array<i64: 23, 8>}, {pipeline_mode = #tpu.pipeline_mode<synchronous>, transform_indices = @transform_1, window_bounds = array<i64: 224, 128>}, {transform_indices = @transform_2, window_bounds = array<i64: 5, 8>}]} {
    %c0 = arith.constant 0 : index
    %c0_0 = arith.constant 0 : index
    %0 = vector.load %arg1[%c0, %c0_0] : memref<23x8xf32, #tpu.memory_space<vmem>>, vector<23x8xf32>
    %1 = vector.extract_strided_slice %0 {offsets = [0, 0], sizes = [1, 8], strides = [1, 1]} : vector<23x8xf32> to vector<1x8xf32>
    %2 = arith.fptosi %1 : vector<1x8xf32> to vector<1x8xi32>
    %3 = tpu.iota {dimensions = array<i32: 0>} : vector<3x8xi32>
    %4 = vector.broadcast %2 : vector<1x8xi32> to vector<3x8xi32>
    %5 = arith.cmpi eq, %3, %4 : vector<3x8xi32>
    %6 = arith.extui %5 : vector<3x8xi1> to vector<3x8xi32>
    %7 = arith.sitofp %6 : vector<3x8xi32> to vector<3x8xf32>
    %c0_1 = arith.constant 0 : index
    %c0_2 = arith.constant 0 : index
    %8 = vector.load %arg2[%c0_1, %c0_2] : memref<224x128xf32, #tpu.memory_space<vmem>>, vector<32x3xf32>
    %c32 = arith.constant 32 : index
    %c0_3 = arith.constant 0 : index
    %9 = vector.load %arg2[%c32, %c0_3] : memref<224x128xf32, #tpu.memory_space<vmem>>, vector<32x23xf32>
    %cst = arith.constant dense<0.000000e+00> : vector<32x8xf32>
    %10 = tpu.matmul %8, %7, %cst {dimension_numbers = #tpu.dot_dimension_numbers<[1], [0], [0], [1], [0, 0, 1, 1], [], []>} : vector<32x3xf32>, vector<3x8xf32>, vector<32x8xf32> -> vector<32x8xf32>
    %cst_4 = arith.constant dense<0.000000e+00> : vector<32x8xf32>
    %11 = tpu.matmul %9, %0, %cst_4 {dimension_numbers = #tpu.dot_dimension_numbers<[1], [0], [0], [1], [0, 0, 1, 1], [], []>} : vector<32x23xf32>, vector<23x8xf32>, vector<32x8xf32> -> vector<32x8xf32>
    %12 = arith.addf %10, %11 : vector<32x8xf32>
    %c64 = arith.constant 64 : index
    %c0_5 = arith.constant 0 : index
    %13 = vector.load %arg2[%c64, %c0_5] : memref<224x128xf32, #tpu.memory_space<vmem>>, vector<3x32xf32>
    %cst_6 = arith.constant dense<0.000000e+00> : vector<3x8xf32>
    %14 = tpu.matmul %13, %12, %cst_6 {dimension_numbers = #tpu.dot_dimension_numbers<[1], [0], [0], [1], [0, 0, 1, 1], [], []>} : vector<3x32xf32>, vector<32x8xf32>, vector<3x8xf32> -> vector<3x8xf32>
    %15 = vector.extract_strided_slice %14 {offsets = [0, 0], sizes = [1, 8], strides = [1, 1]} : vector<3x8xf32> to vector<1x8xf32>
    %cst_7 = arith.constant 1.000000e+00 : f32
    %16 = vector.broadcast %cst_7 : f32 to vector<1x8xf32>
    %17 = arith.addf %16, %15 : vector<1x8xf32>
    %18 = vector.extract_strided_slice %14 {offsets = [1, 0], sizes = [1, 8], strides = [1, 1]} : vector<3x8xf32> to vector<1x8xf32>
    %cst_8 = arith.constant 1.000000e+00 : f32
    %19 = vector.broadcast %cst_8 : f32 to vector<1x8xf32>
    %20 = arith.addf %19, %18 : vector<1x8xf32>
    %21 = arith.mulf %17, %20 : vector<1x8xf32>
    %22 = vector.extract_strided_slice %14 {offsets = [2, 0], sizes = [1, 8], strides = [1, 1]} : vector<3x8xf32> to vector<1x8xf32>
    %cst_9 = arith.constant 1.000000e+00 : f32
    %23 = vector.broadcast %cst_9 : f32 to vector<1x8xf32>
    %24 = arith.addf %23, %22 : vector<1x8xf32>
    %25 = arith.mulf %21, %24 : vector<1x8xf32>
    %26 = vector.broadcast %25 : vector<1x8xf32> to vector<32x8xf32>
    %27 = arith.mulf %12, %26 : vector<32x8xf32>
    %c72 = arith.constant 72 : index
    %c0_10 = arith.constant 0 : index
    %28 = vector.load %arg2[%c72, %c0_10] : memref<224x128xf32, #tpu.memory_space<vmem>>, vector<32x3xf32>
    %c128 = arith.constant 128 : index
    %c0_11 = arith.constant 0 : index
    %29 = vector.load %arg2[%c128, %c0_11] : memref<224x128xf32, #tpu.memory_space<vmem>>, vector<32x32xf32>
    %cst_12 = arith.constant dense<0.000000e+00> : vector<32x8xf32>
    %30 = tpu.matmul %29, %12, %cst_12 {dimension_numbers = #tpu.dot_dimension_numbers<[1], [0], [0], [1], [0, 0, 1, 1], [], []>} : vector<32x32xf32>, vector<32x8xf32>, vector<32x8xf32> -> vector<32x8xf32>
    %31 = vector.extract_strided_slice %28 {offsets = [0, 0], sizes = [32, 1], strides = [1, 1]} : vector<32x3xf32> to vector<32x1xf32>
    %32 = vector.broadcast %31 : vector<32x1xf32> to vector<32x8xf32>
    %33 = arith.addf %30, %32 : vector<32x8xf32>
    %cst_13 = arith.constant 0.000000e+00 : f32
    %34 = vector.broadcast %cst_13 : f32 to vector<32x8xf32>
    %35 = arith.maximumf %33, %34 : vector<32x8xf32>
    %c160 = arith.constant 160 : index
    %c0_14 = arith.constant 0 : index
    %36 = vector.load %arg2[%c160, %c0_14] : memref<224x128xf32, #tpu.memory_space<vmem>>, vector<32x32xf32>
    %cst_15 = arith.constant dense<0.000000e+00> : vector<32x8xf32>
    %37 = tpu.matmul %36, %35, %cst_15 {dimension_numbers = #tpu.dot_dimension_numbers<[1], [0], [0], [1], [0, 0, 1, 1], [], []>} : vector<32x32xf32>, vector<32x8xf32>, vector<32x8xf32> -> vector<32x8xf32>
    %38 = vector.extract_strided_slice %28 {offsets = [0, 1], sizes = [32, 1], strides = [1, 1]} : vector<32x3xf32> to vector<32x1xf32>
    %39 = vector.broadcast %38 : vector<32x1xf32> to vector<32x8xf32>
    %40 = arith.addf %37, %39 : vector<32x8xf32>
    %cst_16 = arith.constant 0.000000e+00 : f32
    %41 = vector.broadcast %cst_16 : f32 to vector<32x8xf32>
    %42 = arith.maximumf %40, %41 : vector<32x8xf32>
    %c192 = arith.constant 192 : index
    %c0_17 = arith.constant 0 : index
    %43 = vector.load %arg2[%c192, %c0_17] : memref<224x128xf32, #tpu.memory_space<vmem>>, vector<32x32xf32>
    %cst_18 = arith.constant dense<0.000000e+00> : vector<32x8xf32>
    %44 = tpu.matmul %43, %42, %cst_18 {dimension_numbers = #tpu.dot_dimension_numbers<[1], [0], [0], [1], [0, 0, 1, 1], [], []>} : vector<32x32xf32>, vector<32x8xf32>, vector<32x8xf32> -> vector<32x8xf32>
    %45 = vector.extract_strided_slice %28 {offsets = [0, 2], sizes = [32, 1], strides = [1, 1]} : vector<32x3xf32> to vector<32x1xf32>
    %46 = vector.broadcast %45 : vector<32x1xf32> to vector<32x8xf32>
    %47 = arith.addf %44, %46 : vector<32x8xf32>
    %cst_19 = arith.constant 0.000000e+00 : f32
    %48 = vector.broadcast %cst_19 : f32 to vector<32x8xf32>
    %49 = arith.maximumf %47, %48 : vector<32x8xf32>
    %c104 = arith.constant 104 : index
    %c0_20 = arith.constant 0 : index
    %50 = vector.load %arg2[%c104, %c0_20] : memref<224x128xf32, #tpu.memory_space<vmem>>, vector<5x32xf32>
    %c112 = arith.constant 112 : index
    %c0_21 = arith.constant 0 : index
    %51 = vector.load %arg2[%c112, %c0_21] : memref<224x128xf32, #tpu.memory_space<vmem>>, vector<5x32xf32>
    %c120 = arith.constant 120 : index
    %c0_22 = arith.constant 0 : index
    %52 = vector.load %arg2[%c120, %c0_22] : memref<224x128xf32, #tpu.memory_space<vmem>>, vector<5x1xf32>
    %cst_23 = arith.constant dense<0.000000e+00> : vector<5x8xf32>
    %53 = tpu.matmul %50, %27, %cst_23 {dimension_numbers = #tpu.dot_dimension_numbers<[1], [0], [0], [1], [0, 0, 1, 1], [], []>} : vector<5x32xf32>, vector<32x8xf32>, vector<5x8xf32> -> vector<5x8xf32>
    %cst_24 = arith.constant dense<0.000000e+00> : vector<5x8xf32>
    %54 = tpu.matmul %51, %49, %cst_24 {dimension_numbers = #tpu.dot_dimension_numbers<[1], [0], [0], [1], [0, 0, 1, 1], [], []>} : vector<5x32xf32>, vector<32x8xf32>, vector<5x8xf32> -> vector<5x8xf32>
    %55 = arith.addf %53, %54 : vector<5x8xf32>
    %56 = vector.broadcast %52 : vector<5x1xf32> to vector<5x8xf32>
    %57 = arith.addf %55, %56 : vector<5x8xf32>
    %c0_25 = arith.constant 0 : index
    %c0_26 = arith.constant 0 : index
    %58 = vector.load %arg3[%c0_25, %c0_26] : memref<5x8xf32, #tpu.memory_space<vmem>>, vector<5x8xf32>
    tpu.vector_store %arg3[%c0_25, %c0_26], %57 {strides = array<i32>} : memref<5x8xf32, #tpu.memory_space<vmem>>, vector<5x8xf32>,
    return
  }
  func.func @transform_0(%arg0: i32) -> (i32, i32) {
    %c0_i32 = arith.constant 0 : i32
    %c0_i32_0 = arith.constant 0 : i32
    return %c0_i32, %arg0 : i32, i32
  }
  func.func @transform_1(%arg0: i32) -> (i32, i32) {
    %c0_i32 = arith.constant 0 : i32
    %c0_i32_0 = arith.constant 0 : i32
    %c0_i32_1 = arith.constant 0 : i32
    return %c0_i32, %c0_i32_0 : i32, i32
  }
  func.func @transform_2(%arg0: i32) -> (i32, i32) {
    %c0_i32 = arith.constant 0 : i32
    %c0_i32_0 = arith.constant 0 : i32
    return %c0_i32, %arg0 : i32, i32
  }
}

</mosaic_0001>

<llo_original>
// kernel: dcn_pallas.1
$region0: #{dcn_pallas.1}
  #allocation0 [shape = 'u32[]', space=smem, size = 0x4, offset = 0x4, fixed_abs, tag = 'smem constant byte address 0x4 - core index']
  #allocation1 [shape = 'u32[72,128]{1,0:T(1,128)}', space=vmem, size = 0x9000, scoped, tag = 'internal scratch']
  %s0 = inlined_call_operand.vmem [shape: f32[23,8], index: 0, kind: input, shape index: {}]
  %s1 = inlined_call_operand.hbm [shape: f32[224,128], index: 1, kind: input, shape index: {}]
  %s2 = inlined_call_operand.vmem [shape: f32[5,8], index: 2, kind: output, shape index: {}]
  %s3 = sld [smem:[#allocation0]]
  $region22: #{dcn_pallas.1} parent=0
    _
  %s5 = ssub.s32 1, %s3
  %s6 = scalar_select 0, %s5, %s3
  $region1: #{dcn_pallas.1} parent=0
    #allocation2 [shape = 'u8[114688]{0}', space=vmem, size = 0x1c000, scoped, tag = 'input window, operand 1, single buffered']
    #allocation3 [shape = 's32[1]{0}', space=sflag, size = 0x4, scoped, tag = 'scoped memory for dcn_pallas.1']
    %7 = vsyncpa [#allocation3], 0
    // Predicated region
    $region2: #{dcn_pallas.1} parent=1 // pred_check
      _
    $region3: #{dcn_pallas.1} parent=1 // pred_check_branch
      %9 = sbr.rel (0) target = $region5
    $region4: #{dcn_pallas.1} parent=1 // pred_region
      _
    $region5: #{dcn_pallas.1} parent=1 // pred_fallthru
      _
    // Predicated region
    $region6: #{dcn_pallas.1} parent=1 // pred_check
      _
    $region7: #{dcn_pallas.1} parent=1 // pred_check_branch
      %11 = sbr.rel (0) target = $region9
    $region8: #{dcn_pallas.1} parent=1 // pred_region
      %13 = vsyncadd [#allocation3], 0
      %s14 = sshll.u32 %s1, 4
      %s15 = int_to_ptr.hbm [resolvable:$true] %s14
      %s16 = sshll.u32 [#allocation2], 4
      %s17 = int_to_ptr.vmem [resolvable:$true] %s16
      %22 = dma.hbm_to_vmem [thread:$0]  %s15, 3584, %s17, [#allocation3], 128, 128, 8
    $region9: #{dcn_pallas.1} parent=1 // pred_fallthru
      _
    // Predicated region
    $region10: #{dcn_pallas.1} parent=1 // pred_check
      _
    $region11: #{dcn_pallas.1} parent=1 // pred_check_branch
      %24 = sbr.rel (0) target = $region13
    $region12: #{dcn_pallas.1} parent=1 // pred_region
      %26 = dma.done [#allocation3], 3584
    $region13: #{dcn_pallas.1} parent=1 // pred_fallthru
      _
    %v27 = vld [vmem:[%s0] sm:$0xff]
    %v28 = vld [vmem:[%s0 + $0x8] sm:$0xff]
    %v29 = vld [vmem:[%s0 + $0x10] sm:$0x7f]
    %v30 = vcvt.f32.s32.to.zero.pseudo %v27
    %v31 = vlaneseq
    %v32 = vshrl.u32 %v31, 7
    %v33 = vperm.slane %v30, 0
    %vm34 = vcmp.eq.s32.totalorder %v32, %v33
    %v35 = vsel %vm34, 1, 0
    %v36 = vcvt.s32.f32 %v35
    %v37 = vld [vmem:[#allocation2] sm:$0xff]
    %v38 = vld [vmem:[#allocation2 + $0x8] sm:$0xff]
    %v39 = vld [vmem:[#allocation2 + $0x10] sm:$0xff]
    %v40 = vld [vmem:[#allocation2 + $0x18] sm:$0xff]
    %v41 = vld [vmem:[#allocation2 + $0x20] sm:$0xff]
    %v42 = vld [vmem:[#allocation2 + $0x28] sm:$0xff]
    %v43 = vld [vmem:[#allocation2 + $0x30] sm:$0xff]
    %v44 = vld [vmem:[#allocation2 + $0x38] sm:$0xff]
    %vm45 = vcmask 187392
    %v47 = vsel %vm45, %v41, 0
    %v50 = vsel %vm45, %v42, 0
    %v53 = vsel %vm45, %v43, 0
    %v56 = vsel %vm45, %v44, 0
    %vm58 = vcmask 1046528
    %v60 = vsel %vm58, %v29, 0
    %62 = vmatpush.msra.mxu0 0.0
    %63 = vmatpush.msra.mxu0 0.0
    %64 = vmatpush.msra.mxu0 0.0
    %65 = vmatpush.msra.mxu0 0.0
    %66 = vmatpush.msra.mxu0 0.0
    %67 = vmatpush.msra.mxu0 0.0
    %68 = vmatpush.msra.mxu0 0.0
    %69 = vmatpush.msra.mxu0 0.0
    %70 = vmatpush.msra.mxu0 0.0
    %71 = vmatpush.msra.mxu0 0.0
    %72 = vmatpush.msra.mxu0 0.0
    %73 = vmatpush.msra.mxu0 0.0
    %74 = vmatpush.msra.mxu0 0.0
    %75 = vmatpush.msra.mxu0 %v60
    %76 = vmatpush.msra.mxu0 %v28
    %77 = vmatpush.msra.mxu0 %v27
    %78 = vmatmul.f32.gmra.mxu0 %v47
    %v79 = vpop.f32.mrf.mxu0
    %v80 = vadd.f32 0.0, %v79
    %81 = vmatmul.f32.gmra.mxu0 %v50
    %v82 = vpop.f32.mrf.mxu0
    %v83 = vadd.f32 0.0, %v82
    %84 = vmatmul.f32.gmra.mxu0 %v53
    %v85 = vpop.f32.mrf.mxu0
    %v86 = vadd.f32 0.0, %v85
    %87 = vmatmul.f32.gmra.mxu0 %v56
    %v88 = vpop.f32.mrf.mxu0
    %v89 = vadd.f32 0.0, %v88
    %90 = vdwg.mxu0
    %vm91 = vcmask 23552
    %v93 = vsel %vm91, %v37, 0
    %v96 = vsel %vm91, %v38, 0
    %v99 = vsel %vm91, %v39, 0
    %v102 = vsel %vm91, %v40, 0
    %vm104 = vcmask 1042432
    %v106 = vsel %vm104, %v36, 0
    %108 = vmatpush.msra.mxu0 0.0
    %109 = vmatpush.msra.mxu0 0.0
    %110 = vmatpush.msra.mxu0 0.0
    %111 = vmatpush.msra.mxu0 0.0
    %112 = vmatpush.msra.mxu0 0.0
    %113 = vmatpush.msra.mxu0 0.0
    %114 = vmatpush.msra.mxu0 0.0
    %115 = vmatpush.msra.mxu0 0.0
    %116 = vmatpush.msra.mxu0 0.0
    %117 = vmatpush.msra.mxu0 0.0
    %118 = vmatpush.msra.mxu0 0.0
    %119 = vmatpush.msra.mxu0 0.0
    %120 = vmatpush.msra.mxu0 0.0
    %121 = vmatpush.msra.mxu0 0.0
    %122 = vmatpush.msra.mxu0 0.0
    %123 = vmatpush.msra.mxu0 %v106
    %124 = vmatmul.f32.gmra.mxu0 %v93
    %v125 = vpop.f32.mrf.mxu0
    %v126 = vadd.f32 %v80, %v125
    %127 = vmatmul.f32.gmra.mxu0 %v96
    %v128 = vpop.f32.mrf.mxu0
    %v129 = vadd.f32 %v83, %v128
    %130 = vmatmul.f32.gmra.mxu0 %v99
    %v131 = vpop.f32.mrf.mxu0
    %v132 = vadd.f32 %v86, %v131
    %133 = vmatmul.f32.gmra.mxu0 %v102
    %v134 = vpop.f32.mrf.mxu0
    %v135 = vadd.f32 %v89, %v134
    %136 = vdwg.mxu0
    %v137 = vld [vmem:[#allocation2 + $0x40] sm:$0x7]
    %vm138 = vcmask 261120
    %v140 = vsel %vm138, %v137, 0
    %142 = vmatpush.msra.mxu0 0.0
    %143 = vmatpush.msra.mxu0 0.0
    %144 = vmatpush.msra.mxu0 0.0
    %145 = vmatpush.msra.mxu0 0.0
    %146 = vmatpush.msra.mxu0 0.0
    %147 = vmatpush.msra.mxu0 0.0
    %148 = vmatpush.msra.mxu0 0.0
    %149 = vmatpush.msra.mxu0 0.0
    %150 = vmatpush.msra.mxu0 0.0
    %151 = vmatpush.msra.mxu0 0.0
    %152 = vmatpush.msra.mxu0 0.0
    %153 = vmatpush.msra.mxu0 0.0
    %154 = vmatpush.msra.mxu0 %v135
    %155 = vmatpush.msra.mxu0 %v132
    %156 = vmatpush.msra.mxu0 %v129
    %157 = vmatpush.msra.mxu0 %v126
    %158 = vmatmul.f32.gmra.mxu0 %v140
    %v159 = vpop.f32.mrf.mxu0
    %v160 = vadd.f32 0.0, %v159
    %161 = vdwg.mxu0
    %v162 = vadd.f32 %v160, 1.0
    %v164 = vrot.slane %v162, 1
    %v166 = vmul.f32 %v162, %v164
    %v167 = vrot.slane %v162, 2
    %v169 = vmul.f32 %v166, %v167
    %v170 = vperm.slane %v169, 0
    %v171 = vmul.f32 %v126, %v170
    %v172 = vmul.f32 %v129, %v170
    %v173 = vmul.f32 %v132, %v170
    %v174 = vmul.f32 %v135, %v170
    %v175 = vld [vmem:[#allocation2 + $0x48] sm:$0xff]
    %v176 = vld [vmem:[#allocation2 + $0x50] sm:$0xff]
    %v177 = vld [vmem:[#allocation2 + $0x58] sm:$0xff]
    %v178 = vld [vmem:[#allocation2 + $0x60] sm:$0xff]
    %v179 = vld [vmem:[#allocation2 + $0x80] sm:$0xff]
    %v180 = vld [vmem:[#allocation2 + $0x88] sm:$0xff]
    %v181 = vld [vmem:[#allocation2 + $0x90] sm:$0xff]
    %v182 = vld [vmem:[#allocation2 + $0x98] sm:$0xff]
    %184 = vset.pattern.permute.xlu0 0
    %185 = vperm.xlu0 %184, %v175
    %v186 = vpop.permute.xlu0 %185
    %189 = vset.pattern.permute.xlu0 0
    %190 = vperm.xlu0 %189, %v176
    %v191 = vpop.permute.xlu0 %190
    %194 = vset.pattern.permute.xlu0 0
    %195 = vperm.xlu0 %194, %v177
    %v196 = vpop.permute.xlu0 %195
    %199 = vset.pattern.permute.xlu0 0
    %200 = vperm.xlu0 %199, %v178
    %v201 = vpop.permute.xlu0 %200
    %v204 = vsel %vm138, %v179, 0
    %v207 = vsel %vm138, %v180, 0
    %v210 = vsel %vm138, %v181, 0
    %v213 = vsel %vm138, %v182, 0
    %215 = vmatpush.msra.mxu0 0.0
    %216 = vmatpush.msra.mxu0 0.0
    %217 = vmatpush.msra.mxu0 0.0
    %218 = vmatpush.msra.mxu0 0.0
    %219 = vmatpush.msra.mxu0 0.0
    %220 = vmatpush.msra.mxu0 0.0
    %221 = vmatpush.msra.mxu0 0.0
    %222 = vmatpush.msra.mxu0 0.0
    %223 = vmatpush.msra.mxu0 0.0
    %224 = vmatpush.msra.mxu0 0.0
    %225 = vmatpush.msra.mxu0 0.0
    %226 = vmatpush.msra.mxu0 0.0
    %227 = vmatpush.msra.mxu0 %v135
    %228 = vmatpush.msra.mxu0 %v132
    %229 = vmatpush.msra.mxu0 %v129
    %230 = vmatpush.msra.mxu0 %v126
    %231 = vmatmul.f32.gmra.mxu0 %v204
    %v232 = vpop.f32.mrf.mxu0
    %v233 = vadd.f32 %v186, %v232
    %234 = vmatmul.f32.gmra.mxu0 %v207
    %v235 = vpop.f32.mrf.mxu0
    %v236 = vadd.f32 %v191, %v235
    %237 = vmatmul.f32.gmra.mxu0 %v210
    %v238 = vpop.f32.mrf.mxu0
    %v239 = vadd.f32 %v196, %v238
    %240 = vmatmul.f32.gmra.mxu0 %v213
    %v241 = vpop.f32.mrf.mxu0
    %v242 = vadd.f32 %v201, %v241
    %243 = vdwg.mxu0
    %v244 = vmax.f32 %v233, 0.0
    %v245 = vmax.f32 %v236, 0.0
    %v246 = vmax.f32 %v239, 0.0
    %v247 = vmax.f32 %v242, 0.0
    %v248 = vld [vmem:[#allocation2 + $0xa0] sm:$0xff]
    %v249 = vld [vmem:[#allocation2 + $0xa8] sm:$0xff]
    %v250 = vld [vmem:[#allocation2 + $0xb0] sm:$0xff]
    %v251 = vld [vmem:[#allocation2 + $0xb8] sm:$0xff]
    %252 = vset.pattern.permute.xlu0 1
    %253 = vperm.xlu0 %252, %v175
    %v254 = vpop.permute.xlu0 %253
    %256 = vset.pattern.permute.xlu0 1
    %257 = vperm.xlu0 %256, %v176
    %v258 = vpop.permute.xlu0 %257
    %260 = vset.pattern.permute.xlu0 1
    %261 = vperm.xlu0 %260, %v177
    %v262 = vpop.permute.xlu0 %261
    %264 = vset.pattern.permute.xlu0 1
    %265 = vperm.xlu0 %264, %v178
    %v266 = vpop.permute.xlu0 %265
    %v269 = vsel %vm138, %v248, 0
    %v272 = vsel %vm138, %v249, 0
    %v275 = vsel %vm138, %v250, 0
    %v278 = vsel %vm138, %v251, 0
    %280 = vmatpush.msra.mxu0 0.0
    %281 = vmatpush.msra.mxu0 0.0
    %282 = vmatpush.msra.mxu0 0.0
    %283 = vmatpush.msra.mxu0 0.0
    %284 = vmatpush.msra.mxu0 0.0
    %285 = vmatpush.msra.mxu0 0.0
    %286 = vmatpush.msra.mxu0 0.0
    %287 = vmatpush.msra.mxu0 0.0
    %288 = vmatpush.msra.mxu0 0.0
    %289 = vmatpush.msra.mxu0 0.0
    %290 = vmatpush.msra.mxu0 0.0
    %291 = vmatpush.msra.mxu0 0.0
    %292 = vmatpush.msra.mxu0 %v247
    %293 = vmatpush.msra.mxu0 %v246
    %294 = vmatpush.msra.mxu0 %v245
    %295 = vmatpush.msra.mxu0 %v244
    %296 = vmatmul.f32.gmra.mxu0 %v269
    %v297 = vpop.f32.mrf.mxu0
    %v298 = vadd.f32 %v254, %v297
    %299 = vmatmul.f32.gmra.mxu0 %v272
    %v300 = vpop.f32.mrf.mxu0
    %v301 = vadd.f32 %v258, %v300
    %302 = vmatmul.f32.gmra.mxu0 %v275
    %v303 = vpop.f32.mrf.mxu0
    %v304 = vadd.f32 %v262, %v303
    %305 = vmatmul.f32.gmra.mxu0 %v278
    %v306 = vpop.f32.mrf.mxu0
    %v307 = vadd.f32 %v266, %v306
    %308 = vdwg.mxu0
    %v309 = vmax.f32 %v298, 0.0
    %v310 = vmax.f32 %v301, 0.0
    %v311 = vmax.f32 %v304, 0.0
    %v312 = vmax.f32 %v307, 0.0
    %v313 = vld [vmem:[#allocation2 + $0xc0] sm:$0xff]
    %v314 = vld [vmem:[#allocation2 + $0xc8] sm:$0xff]
    %v315 = vld [vmem:[#allocation2 + $0xd0] sm:$0xff]
    %v316 = vld [vmem:[#allocation2 + $0xd8] sm:$0xff]
    %317 = vset.pattern.permute.xlu0 2
    %318 = vperm.xlu0 %317, %v175
    %v319 = vpop.permute.xlu0 %318
    %321 = vset.pattern.permute.xlu0 2
    %322 = vperm.xlu0 %321, %v176
    %v323 = vpop.permute.xlu0 %322
    %325 = vset.pattern.permute.xlu0 2
    %326 = vperm.xlu0 %325, %v177
    %v327 = vpop.permute.xlu0 %326
    %329 = vset.pattern.permute.xlu0 2
    %330 = vperm.xlu0 %329, %v178
    %v331 = vpop.permute.xlu0 %330
    %v334 = vsel %vm138, %v313, 0
    %v337 = vsel %vm138, %v314, 0
    %v340 = vsel %vm138, %v315, 0
    %v343 = vsel %vm138, %v316, 0
    %345 = vmatpush.msra.mxu0 0.0
    %346 = vmatpush.msra.mxu0 0.0
    %347 = vmatpush.msra.mxu0 0.0
    %348 = vmatpush.msra.mxu0 0.0
    %349 = vmatpush.msra.mxu0 0.0
    %350 = vmatpush.msra.mxu0 0.0
    %351 = vmatpush.msra.mxu0 0.0
    %352 = vmatpush.msra.mxu0 0.0
    %353 = vmatpush.msra.mxu0 0.0
    %354 = vmatpush.msra.mxu0 0.0
    %355 = vmatpush.msra.mxu0 0.0
    %356 = vmatpush.msra.mxu0 0.0
    %357 = vmatpush.msra.mxu0 %v312
    %358 = vmatpush.msra.mxu0 %v311
    %359 = vmatpush.msra.mxu0 %v310
    %360 = vmatpush.msra.mxu0 %v309
    %361 = vmatmul.f32.gmra.mxu0 %v334
    %v362 = vpop.f32.mrf.mxu0
    %v363 = vadd.f32 %v319, %v362
    %364 = vmatmul.f32.gmra.mxu0 %v337
    %v365 = vpop.f32.mrf.mxu0
    %v366 = vadd.f32 %v323, %v365
    %367 = vmatmul.f32.gmra.mxu0 %v340
    %v368 = vpop.f32.mrf.mxu0
    %v369 = vadd.f32 %v327, %v368
    %370 = vmatmul.f32.gmra.mxu0 %v343
    %v371 = vpop.f32.mrf.mxu0
    %v372 = vadd.f32 %v331, %v371
    %373 = vdwg.mxu0
    %v374 = vmax.f32 %v363, 0.0
    %v375 = vmax.f32 %v366, 0.0
    %v376 = vmax.f32 %v369, 0.0
    %v377 = vmax.f32 %v372, 0.0
    %v378 = vld [vmem:[#allocation2 + $0x68] sm:$0x1f]
    %v379 = vld [vmem:[#allocation2 + $0x70] sm:$0x1f]
    %v380 = vld [vmem:[#allocation2 + $0x78] sm:$0x1f]
    %v382 = vsel %vm138, %v379, 0
    %384 = vmatpush.msra.mxu0 0.0
    %385 = vmatpush.msra.mxu0 0.0
    %386 = vmatpush.msra.mxu0 0.0
    %387 = vmatpush.msra.mxu0 0.0
    %388 = vmatpush.msra.mxu0 0.0
    %389 = vmatpush.msra.mxu0 0.0
    %390 = vmatpush.msra.mxu0 0.0
    %391 = vmatpush.msra.mxu0 0.0
    %392 = vmatpush.msra.mxu0 0.0
    %393 = vmatpush.msra.mxu0 0.0
    %394 = vmatpush.msra.mxu0 0.0
    %395 = vmatpush.msra.mxu0 0.0
    %396 = vmatpush.msra.mxu0 %v377
    %397 = vmatpush.msra.mxu0 %v376
    %398 = vmatpush.msra.mxu0 %v375
    %399 = vmatpush.msra.mxu0 %v374
    %400 = vmatmul.f32.gmra.mxu0 %v382
    %v401 = vpop.f32.mrf.mxu0
    %v402 = vadd.f32 0.0, %v401
    %403 = vdwg.mxu0
    %v405 = vsel %vm138, %v378, 0
    %407 = vmatpush.msra.mxu0 0.0
    %408 = vmatpush.msra.mxu0 0.0
    %409 = vmatpush.msra.mxu0 0.0
    %410 = vmatpush.msra.mxu0 0.0
    %411 = vmatpush.msra.mxu0 0.0
    %412 = vmatpush.msra.mxu0 0.0
    %413 = vmatpush.msra.mxu0 0.0
    %414 = vmatpush.msra.mxu0 0.0
    %415 = vmatpush.msra.mxu0 0.0
    %416 = vmatpush.msra.mxu0 0.0
    %417 = vmatpush.msra.mxu0 0.0
    %418 = vmatpush.msra.mxu0 0.0
    %419 = vmatpush.msra.mxu0 %v174
    %420 = vmatpush.msra.mxu0 %v173
    %421 = vmatpush.msra.mxu0 %v172
    %422 = vmatpush.msra.mxu0 %v171
    %423 = vmatmul.f32.gmra.mxu0 %v405
    %v424 = vpop.f32.mrf.mxu0
    %v425 = vadd.f32 %v402, %v424
    %426 = vdwg.mxu0
    %428 = vset.pattern.permute.xlu0 0
    %429 = vperm.xlu0 %428, %v380
    %v430 = vpop.permute.xlu0 %429
    %v432 = vadd.f32 %v425, %v430
    %vm433 = vcmask 61440
    %434 = vst.msk [vmem:[%s2] sm:$0x1f] %vm433, %v432
    // Predicated region
    $region14: #{dcn_pallas.1} parent=1 // pred_check
      _
    $region15: #{dcn_pallas.1} parent=1 // pred_check_branch
      %436 = sbr.rel (0) target = $region17
    $region16: #{dcn_pallas.1} parent=1 // pred_region
      _
    $region17: #{dcn_pallas.1} parent=1 // pred_fallthru
      _
    // Predicated region
    $region18: #{dcn_pallas.1} parent=1 // pred_check
      _
    $region19: #{dcn_pallas.1} parent=1 // pred_check_branch
      %438 = sbr.rel (0) target = $region21
    $region20: #{dcn_pallas.1} parent=1 // pred_region
      _
    $region21: #{dcn_pallas.1} parent=1 // pred_fallthru
      _
    %439 = vsyncpa [#allocation3], 1

</llo_original>
